<compile_context>
chip_gen: v7x
topology: tpu7x:2x2x1
jax: 0.10.0
libtpu: 0.0.40
codegen_flags: <defaults>
</compile_context>

<pallas_src>
import jax
import jax.numpy as jnp
from jax.experimental import pallas as pl
from jax.experimental.pallas import tpu as pltpu

HIDDEN = 64
WIDE = 2 * HIDDEN  # fused actor|value width = 128 lanes


def _mlp_policy_kernel(x_ref, stats_ref, w1_ref, b_ref, w2_ref, w3_ref,
                       out_ref):
    x = x_ref[...]

    # ObsNorm((1, num_inputs), clip=5): (x - mean) * inv_std, clipped to +/-5.
    mean = stats_ref[0:1, :]
    inv_std = stats_ref[1:2, :]
    xn = jnp.clip((x - mean) * inv_std, -5.0, 5.0)

    # Compute dtype for the MXU path (bf16 when the packed weights are bf16).
    cdt = w1_ref.dtype

    # Fused layer 1: [a_fc1 | v_fc1] -> (tile_b, 128), one MXU matmul (bf16
    # inputs, f32 accumulate) + f32 tanh.
    pre1 = jnp.dot(xn.astype(cdt), w1_ref[...],
                   preferred_element_type=jnp.float32) + b_ref[0:1, :]
    h1 = jnp.tanh(pre1)

    # Fused layer 2: block-diagonal [[a_fc2, 0], [0, v_fc2]] -> (tile_b, 128).
    pre2 = jnp.dot(h1.astype(cdt), w2_ref[...],
                   preferred_element_type=jnp.float32) + b_ref[1:2, :]
    h2 = jnp.tanh(pre2)

    actor = h2[:, :HIDDEN]   # actor output      (tile_b, 64)
    h_v = h2[:, HIDDEN:]     # value-head hidden (tile_b, 64)

    # v_fc3: N=1 output -> lane-parallel multiply + cross-lane (XLU) reduce,
    # instead of wasting an MXU matmul on a 1-lane-wide result.
    w3 = w3_ref[0:1, :]            # (1, 64) weights
    vb3 = w3_ref[1:2, 0:1]         # (1, 1) bias
    value = jnp.sum(h_v * w3, axis=-1, keepdims=True) + vb3

    # Lane-dense 128-wide store: actor in lanes 0..63, value broadcast into
    # lanes 64..127 (wrapper slices lane 64). Single unmasked dense writeback.
    out_ref[...] = jnp.concatenate(
        [actor, jnp.broadcast_to(value, (actor.shape[0], HIDDEN))], axis=-1)


def _init_linear(key, out_features, in_features):
    """weights_init_mlp: N(0,1) rows normalized to unit L2 norm, zero bias."""
    w = jax.random.normal(key, (out_features, in_features), dtype=jnp.float32)
    w = w / jnp.sqrt(jnp.sum(w * w, axis=1, keepdims=True))
    b = jnp.zeros((out_features,), dtype=jnp.float32)
    return w, b


def make_mlp_policy_params(num_inputs, key=None):
    if key is None:
        key = jax.random.PRNGKey(0)
    keys = jax.random.split(key, 5)
    a_fc1_w, a_fc1_b = _init_linear(keys[0], HIDDEN, num_inputs)
    a_fc2_w, a_fc2_b = _init_linear(keys[1], HIDDEN, HIDDEN)
    v_fc1_w, v_fc1_b = _init_linear(keys[2], HIDDEN, num_inputs)
    v_fc2_w, v_fc2_b = _init_linear(keys[3], HIDDEN, HIDDEN)
    v_fc3_w, v_fc3_b = _init_linear(keys[4], 1, HIDDEN)
    return {
        "obs_mean": jnp.zeros((1, num_inputs), jnp.float32),
        "obs_var": jnp.ones((1, num_inputs), jnp.float32),
        "a_fc1": (a_fc1_w, a_fc1_b),
        "a_fc2": (a_fc2_w, a_fc2_b),
        "v_fc1": (v_fc1_w, v_fc1_b),
        "v_fc2": (v_fc2_w, v_fc2_b),
        "v_fc3": (v_fc3_w, v_fc3_b),
    }


def _default_tile_b(B):
    if B <= 8:
        return B
    # At least 2 grid steps so v7x's two TensorCores both get work, but tiles
    # as large as possible (>= 512 rows amortizes the ~0.35 us/step overhead).
    # Capped at 2048 rows: double-buffered x block + 128-lane output slab stay
    # well under the scoped-VMEM budget on every generation.
    half = pl.cdiv(B, 2)
    return min(2048, ((half + 7) // 8) * 8)


def mlp_policy_forward(x, params, tile_b=None, use_bf16=True):
    """x: (B, num_inputs) f32 -> (value (B, 1), actor (B, 64))."""
    B, num_inputs = x.shape
    if tile_b is None:
        tile_b = _default_tile_b(B)
    grid = (pl.cdiv(B, tile_b),)

    vw1, vb1 = params["v_fc1"]
    vw2, vb2 = params["v_fc2"]
    vw3, vb3 = params["v_fc3"]
    aw1, ab1 = params["a_fc1"]
    aw2, ab2 = params["a_fc2"]

    # ---- one-time parameter packing (plain XLA, outside the kernel) ----
    w_dtype = jnp.bfloat16 if use_bf16 else jnp.float32

    inv_std = 1.0 / jnp.sqrt(params["obs_var"] + 1e-8)
    stats = jnp.concatenate([params["obs_mean"], inv_std], axis=0)   # (2, In)

    # Lanes 0..63 = actor head, lanes 64..127 = value head.
    w1cat = jnp.concatenate([aw1.T, vw1.T], axis=1).astype(w_dtype)  # (In, 128)
    zeros = jnp.zeros((HIDDEN, HIDDEN), jnp.float32)
    w2blk = jnp.concatenate(
        [jnp.concatenate([aw2.T, zeros], axis=1),
         jnp.concatenate([zeros, vw2.T], axis=1)],
        axis=0).astype(w_dtype)                                      # (128, 128)
    bcat = jnp.stack([jnp.concatenate([ab1, vb1]),
                      jnp.concatenate([ab2, vb2])])                  # (2, 128) f32
    w3b = jnp.stack([vw3.reshape(-1),
                     jnp.full((HIDDEN,), vb3[0], jnp.float32)])      # (2, 64) f32

    def resident(shape):
        # Same block index every grid step -> stays VMEM-resident.
        return pl.BlockSpec(shape, lambda i: (0, 0))

    out = pl.pallas_call(
        _mlp_policy_kernel,
        out_shape=jax.ShapeDtypeStruct((B, WIDE), jnp.float32),
        grid=grid,
        in_specs=[
            pl.BlockSpec((tile_b, num_inputs), lambda i: (i, 0)),  # x (streamed)
            resident((2, num_inputs)),     # obs mean / inv_std
            resident((num_inputs, WIDE)),  # fused layer-1 weight (bf16/f32)
            resident((2, WIDE)),           # fused layer-1/2 biases (f32)
            resident((WIDE, WIDE)),        # block-diagonal layer-2 weight
            resident((2, HIDDEN)),         # v_fc3 weight row + bias row (f32)
        ],
        out_specs=pl.BlockSpec((tile_b, WIDE), lambda i: (i, 0)),   # lane-dense
        compiler_params=pltpu.CompilerParams(
            dimension_semantics=("parallel",),
            vmem_limit_bytes=32 * 1024 * 1024,
        ),
    )(x, stats, w1cat, bcat, w2blk, w3b)

    actor = out[:, :HIDDEN]
    value = out[:, HIDDEN:HIDDEN + 1]
    return value, actor


def _reference_forward(x, params):
    xn = (x - params["obs_mean"]) / jnp.sqrt(params["obs_var"] + 1e-8)
    xn = jnp.clip(xn, -5.0, 5.0)

    def lin(h, wb):
        w, b = wb
        return h @ w.T + b

    h = jnp.tanh(lin(xn, params["v_fc1"]))
    h = jnp.tanh(lin(h, params["v_fc2"]))
    value = lin(h, params["v_fc3"])
    a = jnp.tanh(lin(xn, params["a_fc1"]))
    actor = jnp.tanh(lin(a, params["a_fc2"]))
    return value, actor


if __name__ == "__main__":
    num_inputs = 16
    batch = 16
    tile_b = 8  # small tile so the demo exercises a grid of 2 steps

    key = jax.random.PRNGKey(0)
    k_param, k_x = jax.random.split(key)
    params = make_mlp_policy_params(num_inputs, key=k_param)
    x = jax.random.normal(k_x, (batch, num_inputs), dtype=jnp.float32)

    ref_value, ref_actor = _reference_forward(x, params)

    # Exact-semantics f32 path: tight tolerance.
    value32, actor32 = mlp_policy_forward(x, params, tile_b=tile_b,
                                          use_bf16=False)
    jax.block_until_ready((value32, actor32))
    assert value32.shape == (batch, 1) and actor32.shape == (batch, HIDDEN)
    assert jnp.allclose(value32, ref_value, atol=1e-5, rtol=1e-5)
    assert jnp.allclose(actor32, ref_actor, atol=1e-5, rtol=1e-5)

    # Optimized bf16-MXU path: bf16-appropriate tolerance.
    value, actor = mlp_policy_forward(x, params, tile_b=tile_b, use_bf16=True)
    jax.block_until_ready((value, actor))
    assert value.shape == (batch, 1) and actor.shape == (batch, HIDDEN)
    assert jnp.allclose(value, ref_value, atol=1e-1, rtol=1e-1)
    assert jnp.allclose(actor, ref_actor, atol=1e-1, rtol=1e-1)

    print("KERNEL_OK")
</pallas_src>

<mosaic_0001>
module attributes {stable_mosaic.version = 11 : i64} {
  func.func @_mlp_policy_kernel(%arg0: i32, %arg1: memref<8x16xf32, #tpu.memory_space<vmem>>, %arg2: memref<2x16xf32, #tpu.memory_space<vmem>>, %arg3: memref<16x128xf32, #tpu.memory_space<vmem>>, %arg4: memref<2x128xf32, #tpu.memory_space<vmem>>, %arg5: memref<128x128xf32, #tpu.memory_space<vmem>>, %arg6: memref<2x64xf32, #tpu.memory_space<vmem>>, %arg7: memref<8x128xf32, #tpu.memory_space<vmem>>) attributes {dimension_semantics = [#tpu.dimension_semantics<parallel>], iteration_bounds = array<i64: 2>, scalar_prefetch = 0 : i64, scratch_operands = 0 : i64, tpu.core_type = #tpu.core_type<tc>, window_params = [{transform_indices = @transform_0, window_bounds = array<i64: 8, 16>}, {pipeline_mode = #tpu.pipeline_mode<synchronous>, transform_indices = @transform_1, window_bounds = array<i64: 2, 16>}, {pipeline_mode = #tpu.pipeline_mode<synchronous>, transform_indices = @transform_2, window_bounds = array<i64: 16, 128>}, {pipeline_mode = #tpu.pipeline_mode<synchronous>, transform_indices = @transform_3, window_bounds = array<i64: 2, 128>}, {pipeline_mode = #tpu.pipeline_mode<synchronous>, transform_indices = @transform_4, window_bounds = array<i64: 128, 128>}, {pipeline_mode = #tpu.pipeline_mode<synchronous>, transform_indices = @transform_5, window_bounds = array<i64: 2, 64>}, {transform_indices = @transform_6, window_bounds = array<i64: 8, 128>}]} {
    %c0 = arith.constant 0 : index
    %c0_0 = arith.constant 0 : index
    %0 = vector.load %arg1[%c0, %c0_0] : memref<8x16xf32, #tpu.memory_space<vmem>>, vector<8x16xf32>
    %c0_1 = arith.constant 0 : index
    %c0_2 = arith.constant 0 : index
    %1 = vector.load %arg2[%c0_1, %c0_2] : memref<2x16xf32, #tpu.memory_space<vmem>>, vector<1x16xf32>
    %c1 = arith.constant 1 : index
    %c0_3 = arith.constant 0 : index
    %2 = vector.load %arg2[%c1, %c0_3] : memref<2x16xf32, #tpu.memory_space<vmem>>, vector<1x16xf32>
    %3 = vector.broadcast %1 : vector<1x16xf32> to vector<8x16xf32>
    %4 = arith.subf %0, %3 : vector<8x16xf32>
    %5 = vector.broadcast %2 : vector<1x16xf32> to vector<8x16xf32>
    %6 = arith.mulf %4, %5 : vector<8x16xf32>
    %cst = arith.constant -5.000000e+00 : f32
    %cst_4 = arith.constant 5.000000e+00 : f32
    %7 = vector.broadcast %cst : f32 to vector<8x16xf32>
    %8 = arith.maximumf %7, %6 : vector<8x16xf32>
    %9 = vector.broadcast %cst_4 : f32 to vector<8x16xf32>
    %10 = arith.minimumf %9, %8 : vector<8x16xf32>
    %c0_5 = arith.constant 0 : index
    %c0_6 = arith.constant 0 : index
    %11 = vector.load %arg3[%c0_5, %c0_6] : memref<16x128xf32, #tpu.memory_space<vmem>>, vector<16x128xf32>
    %cst_7 = arith.constant dense<0.000000e+00> : vector<8x128xf32>
    %12 = tpu.matmul %10, %11, %cst_7 {dimension_numbers = #tpu.dot_dimension_numbers<[1], [0], [0], [1], [0, 0, 1, 1], [], []>} : vector<8x16xf32>, vector<16x128xf32>, vector<8x128xf32> -> vector<8x128xf32>
    %c0_8 = arith.constant 0 : index
    %c0_9 = arith.constant 0 : index
    %13 = vector.load %arg4[%c0_8, %c0_9] : memref<2x128xf32, #tpu.memory_space<vmem>>, vector<1x128xf32>
    %14 = vector.broadcast %13 : vector<1x128xf32> to vector<8x128xf32>
    %15 = arith.addf %12, %14 : vector<8x128xf32>
    %16 = math.tanh %15 : vector<8x128xf32>
    %c0_10 = arith.constant 0 : index
    %c0_11 = arith.constant 0 : index
    %17 = vector.load %arg5[%c0_10, %c0_11] : memref<128x128xf32, #tpu.memory_space<vmem>>, vector<128x128xf32>
    %cst_12 = arith.constant dense<0.000000e+00> : vector<8x128xf32>
    %18 = tpu.matmul %16, %17, %cst_12 {dimension_numbers = #tpu.dot_dimension_numbers<[1], [0], [0], [1], [0, 0, 1, 1], [], []>} : vector<8x128xf32>, vector<128x128xf32>, vector<8x128xf32> -> vector<8x128xf32>
    %c1_13 = arith.constant 1 : index
    %c0_14 = arith.constant 0 : index
    %19 = vector.load %arg4[%c1_13, %c0_14] : memref<2x128xf32, #tpu.memory_space<vmem>>, vector<1x128xf32>
    %20 = vector.broadcast %19 : vector<1x128xf32> to vector<8x128xf32>
    %21 = arith.addf %18, %20 : vector<8x128xf32>
    %22 = math.tanh %21 : vector<8x128xf32>
    %23 = vector.extract_strided_slice %22 {offsets = [0, 0], sizes = [8, 64], strides = [1, 1]} : vector<8x128xf32> to vector<8x64xf32>
    %24 = vector.extract_strided_slice %22 {offsets = [0, 64], sizes = [8, 64], strides = [1, 1]} : vector<8x128xf32> to vector<8x64xf32>
    %c0_15 = arith.constant 0 : index
    %c0_16 = arith.constant 0 : index
    %25 = vector.load %arg6[%c0_15, %c0_16] : memref<2x64xf32, #tpu.memory_space<vmem>>, vector<1x64xf32>
    %c1_17 = arith.constant 1 : index
    %c0_18 = arith.constant 0 : index
    %26 = vector.load %arg6[%c1_17, %c0_18] : memref<2x64xf32, #tpu.memory_space<vmem>>, vector<1x1xf32>
    %27 = vector.broadcast %25 : vector<1x64xf32> to vector<8x64xf32>
    %28 = arith.mulf %24, %27 : vector<8x64xf32>
    %cst_19 = arith.constant dense<0.000000e+00> : vector<8xf32>
    %29 = vector.multi_reduction <add>, %28, %cst_19 [1] : vector<8x64xf32> to vector<8xf32>
    %30 = vector.shape_cast %29 : vector<8xf32> to vector<8x1xf32>
    %31 = vector.broadcast %26 : vector<1x1xf32> to vector<8x1xf32>
    %32 = arith.addf %30, %31 : vector<8x1xf32>
    %33 = vector.shape_cast %32 : vector<8x1xf32> to vector<8x1xf32>
    %34 = vector.broadcast %33 : vector<8x1xf32> to vector<8x64xf32>
    %35 = tpu.concatenate %23, %34 in 1 : vector<8x64xf32>, vector<8x64xf32> -> vector<8x128xf32>
    %c0_20 = arith.constant 0 : index
    %c0_21 = arith.constant 0 : index
    %36 = vector.load %arg7[%c0_20, %c0_21] : memref<8x128xf32, #tpu.memory_space<vmem>>, vector<8x128xf32>
    tpu.vector_store %arg7[%c0_20, %c0_21], %35 {strides = array<i32>} : memref<8x128xf32, #tpu.memory_space<vmem>>, vector<8x128xf32>,
    return
  }
  func.func @transform_0(%arg0: i32) -> (i32, i32) {
    %c0_i32 = arith.constant 0 : i32
    %c0_i32_0 = arith.constant 0 : i32
    return %arg0, %c0_i32 : i32, i32
  }
  func.func @transform_1(%arg0: i32) -> (i32, i32) {
    %c0_i32 = arith.constant 0 : i32
    %c0_i32_0 = arith.constant 0 : i32
    %c0_i32_1 = arith.constant 0 : i32
    return %c0_i32, %c0_i32_0 : i32, i32
  }
  func.func @transform_2(%arg0: i32) -> (i32, i32) {
    %c0_i32 = arith.constant 0 : i32
    %c0_i32_0 = arith.constant 0 : i32
    %c0_i32_1 = arith.constant 0 : i32
    return %c0_i32, %c0_i32_0 : i32, i32
  }
  func.func @transform_3(%arg0: i32) -> (i32, i32) {
    %c0_i32 = arith.constant 0 : i32
    %c0_i32_0 = arith.constant 0 : i32
    %c0_i32_1 = arith.constant 0 : i32
    return %c0_i32, %c0_i32_0 : i32, i32
  }
  func.func @transform_4(%arg0: i32) -> (i32, i32) {
    %c0_i32 = arith.constant 0 : i32
    %c0_i32_0 = arith.constant 0 : i32
    %c0_i32_1 = arith.constant 0 : i32
    return %c0_i32, %c0_i32_0 : i32, i32
  }
  func.func @transform_5(%arg0: i32) -> (i32, i32) {
    %c0_i32 = arith.constant 0 : i32
    %c0_i32_0 = arith.constant 0 : i32
    %c0_i32_1 = arith.constant 0 : i32
    return %c0_i32, %c0_i32_0 : i32, i32
  }
  func.func @transform_6(%arg0: i32) -> (i32, i32) {
    %c0_i32 = arith.constant 0 : i32
    %c0_i32_0 = arith.constant 0 : i32
    return %arg0, %c0_i32 : i32, i32
  }
}

</mosaic_0001>

<llo_original>
// kernel: tpu_custom_call.1
$region0: #{tpu_custom_call.1}
  #allocation0 [shape = 'u32[]', space=smem, size = 0x4, offset = 0x4, fixed_abs, tag = 'smem constant byte address 0x4 - core index']
  #allocation1 [shape = 'u32[144,128]{1,0:T(1,128)}', space=vmem, size = 0x12000, scoped, tag = 'internal scratch']
  %s0 = inlined_call_operand.hbm [shape: f32[16,16], index: 0, kind: input, shape index: {}]
  %s1 = inlined_call_operand.vmem [shape: f32[2,16], index: 1, kind: input, shape index: {}]
  %s2 = inlined_call_operand.hbm [shape: f32[16,128], index: 2, kind: input, shape index: {}]
  %s3 = inlined_call_operand.vmem [shape: f32[2,128], index: 3, kind: input, shape index: {}]
  %s4 = inlined_call_operand.hbm [shape: f32[128,128], index: 4, kind: input, shape index: {}]
  %s5 = inlined_call_operand.vmem [shape: f32[2,64], index: 5, kind: input, shape index: {}]
  %s6 = inlined_call_operand.hbm [shape: f32[16,128], index: 6, kind: output, shape index: {}]
  %s7 = sld [smem:[#allocation0]]
  $region69: #{tpu_custom_call.1} parent=0
    _
  %s9 = ssub.s32 1, %s7
  %s10 = scalar_select 0, %s9, %s7
  $region1: #{tpu_custom_call.1} parent=0
    #allocation2 [shape = 'u8[8192]{0}', space=vmem, size = 0x2000, scoped, tag = 'input window, operand 0']
    #allocation3 [shape = 's32[2]{0}', space=sflag, size = 0x8, scoped, tag = 'scoped memory for tpu_custom_call.1']
    #allocation4 [shape = 's32[2]{0}', space=sflag, size = 0x8, scoped, tag = 'scoped memory for tpu_custom_call.1']
    #allocation5 [shape = 'u8[8192]{0}', space=vmem, size = 0x2000, scoped, tag = 'input window, operand 2, single buffered']
    #allocation6 [shape = 's32[1]{0}', space=sflag, size = 0x4, scoped, tag = 'scoped memory for tpu_custom_call.1']
    #allocation7 [shape = 'u8[65536]{0}', space=vmem, size = 0x10000, scoped, tag = 'input window, operand 4, single buffered']
    #allocation8 [shape = 'u8[8192]{0}', space=vmem, size = 0x2000, scoped, tag = 'output window, operand 0']
    %11 = vsyncpa [#allocation3], 0
    %s12 = scalar_lea.sflag [#allocation3], 1
    %13 = vsyncpa %s12, 0
    %14 = vsyncpa [#allocation6], 0
    %15 = vsyncpa [#allocation4], 0
    %s16 = scalar_lea.sflag [#allocation4], 1
    %17 = vsyncpa %s16, 0
    loop: start=0, step=1, limit=4
    $region2: #{tpu_custom_call.1} parent=1 // loop_pre_header
      _
    $region3: #{tpu_custom_call.1} parent=1 // loop_header
      %s19 = sphi 0, %s23
      %p20 = scmp.ge.s32.totalorder %s19, 4
      %s29 = sphi 0, %s31
      %s32 = sphi 0, %s29
      %s33 = sphi 0, %s32
      %s49 = sphi 0, %s33
      %s53 = sphi 0, %s53
      %s55 = sphi 0, %s53
      %s56 = sphi 0, %s55
      %s70 = sphi 0, %s56
      %s74 = sphi 0, %s74
      %s76 = sphi 0, %s74
      %s77 = sphi 0, %s76
      %s91 = sphi 0, %s77
      %s95 = sphi 0, %s95
      %s97 = sphi 0, %s95
      %s98 = sphi 0, %s97
      %s112 = sphi 0, %s98
      %s116 = sphi 0, %s116
      %s118 = sphi 0, %s116
      %s119 = sphi 0, %s118
      %s133 = sphi 0, %s119
      %s137 = sphi 0, %s137
      %s139 = sphi 0, %s137
      %s140 = sphi 0, %s139
      %s154 = sphi 0, %s140
      %s160 = sphi 0, %s162
      %s163 = sphi 0, %s160
      %s164 = sphi 0, %s163
      %s180 = sphi 0, %s164
    $region4: #{tpu_custom_call.1} parent=1 // loop_header_branch
      %22 = sbr.rel (%p20) target = $region8
    $region5: #{tpu_custom_call.1} parent=1 // loop_body
      %s24 = ssub.s32 %s19, 1
      %s25 = ssub.s32 %s19, 2
      %s26 = sadd.s32 %s19, 1
      %s27 = ssub.s32 %s19, %s26
      %p28 = scmp.eq.s32.totalorder %s27, 0
      %s30 = sadd.s32 %s29, 1
      %s31 = scalar_select %p28, %s29, %s30
      %p34 = pneg %p28
      %p35 = scmp.eq.s32.totalorder %s19, 1
      %p36 = por %p34, %p35
      %p37 = scmp.ne.s32.totalorder %s29, %s32
      %p38 = scmp.eq.s32.totalorder %s19, 0
      %p39 = por %p37, %p38
      %p40 = scmp.ne.s32.totalorder %s29, %s32
      %p41 = scmp.eq.s32.totalorder %s24, 1
      %p42 = por %p40, %p41
      %p43 = scmp.ne.s32.totalorder %s32, %s33
      %p44 = scmp.eq.s32.totalorder %s24, 0
      %p45 = por %p43, %p44
      %p46 = scmp.ne.s32.totalorder %s32, %s33
      %p47 = scmp.eq.s32.totalorder %s25, 1
      %p48 = por %p46, %p47
      %p50 = scmp.ne.s32.totalorder %s33, %s49
      %p51 = scmp.eq.s32.totalorder %s25, 0
      %p52 = por %p50, %p51
      %s54 = sadd.s32 %s53, 1
      %p57 = scmp.eq.s32.totalorder %s19, 1
      %p58 = scmp.ne.s32.totalorder %s53, %s55
      %p59 = scmp.eq.s32.totalorder %s19, 0
      %p60 = por %p58, %p59
      %p61 = scmp.ne.s32.totalorder %s53, %s55
      %p62 = scmp.eq.s32.totalorder %s24, 1
      %p63 = por %p61, %p62
      %p64 = scmp.ne.s32.totalorder %s55, %s56
      %p65 = scmp.eq.s32.totalorder %s24, 0
      %p66 = por %p64, %p65
      %p67 = scmp.ne.s32.totalorder %s55, %s56
      %p68 = scmp.eq.s32.totalorder %s25, 1
      %p69 = por %p67, %p68
      %p71 = scmp.ne.s32.totalorder %s56, %s70
      %p72 = scmp.eq.s32.totalorder %s25, 0
      %p73 = por %p71, %p72
      %s75 = sadd.s32 %s74, 1
      %p78 = scmp.eq.s32.totalorder %s19, 1
      %p79 = scmp.ne.s32.totalorder %s74, %s76
      %p80 = scmp.eq.s32.totalorder %s19, 0
      %p81 = por %p79, %p80
      %p82 = scmp.ne.s32.totalorder %s74, %s76
      %p83 = scmp.eq.s32.totalorder %s24, 1
      %p84 = por %p82, %p83
      %p85 = scmp.ne.s32.totalorder %s76, %s77
      %p86 = scmp.eq.s32.totalorder %s24, 0
      %p87 = por %p85, %p86
      %p88 = scmp.ne.s32.totalorder %s76, %s77
      %p89 = scmp.eq.s32.totalorder %s25, 1
      %p90 = por %p88, %p89
      %p92 = scmp.ne.s32.totalorder %s77, %s91
      %p93 = scmp.eq.s32.totalorder %s25, 0
      %p94 = por %p92, %p93
      %s96 = sadd.s32 %s95, 1
      %p99 = scmp.eq.s32.totalorder %s19, 1
      %p100 = scmp.ne.s32.totalorder %s95, %s97
      %p101 = scmp.eq.s32.totalorder %s19, 0
      %p102 = por %p100, %p101
      %p103 = scmp.ne.s32.totalorder %s95, %s97
      %p104 = scmp.eq.s32.totalorder %s24, 1
      %p105 = por %p103, %p104
      %p106 = scmp.ne.s32.totalorder %s97, %s98
      %p107 = scmp.eq.s32.totalorder %s24, 0
      %p108 = por %p106, %p107
      %p109 = scmp.ne.s32.totalorder %s97, %s98
      %p110 = scmp.eq.s32.totalorder %s25, 1
      %p111 = por %p109, %p110
      %p113 = scmp.ne.s32.totalorder %s98, %s112
      %p114 = scmp.eq.s32.totalorder %s25, 0
      %p115 = por %p113, %p114
      %s117 = sadd.s32 %s116, 1
      %p120 = scmp.eq.s32.totalorder %s19, 1
      %p121 = scmp.ne.s32.totalorder %s116, %s118
      %p122 = scmp.eq.s32.totalorder %s19, 0
      %p123 = por %p121, %p122
      %p124 = scmp.ne.s32.totalorder %s116, %s118
      %p125 = scmp.eq.s32.totalorder %s24, 1
      %p126 = por %p124, %p125
      %p127 = scmp.ne.s32.totalorder %s118, %s119
      %p128 = scmp.eq.s32.totalorder %s24, 0
      %p129 = por %p127, %p128
      %p130 = scmp.ne.s32.totalorder %s118, %s119
      %p131 = scmp.eq.s32.totalorder %s25, 1
      %p132 = por %p130, %p131
      %p134 = scmp.ne.s32.totalorder %s119, %s133
      %p135 = scmp.eq.s32.totalorder %s25, 0
      %p136 = por %p134, %p135
      %s138 = sadd.s32 %s137, 1
      %p141 = scmp.eq.s32.totalorder %s19, 1
      %p142 = scmp.ne.s32.totalorder %s137, %s139
      %p143 = scmp.eq.s32.totalorder %s19, 0
      %p144 = por %p142, %p143
      %p145 = scmp.ne.s32.totalorder %s137, %s139
      %p146 = scmp.eq.s32.totalorder %s24, 1
      %p147 = por %p145, %p146
      %p148 = scmp.ne.s32.totalorder %s139, %s140
      %p149 = scmp.eq.s32.totalorder %s24, 0
      %p150 = por %p148, %p149
      %p151 = scmp.ne.s32.totalorder %s139, %s140
      %p152 = scmp.eq.s32.totalorder %s25, 1
      %p153 = por %p151, %p152
      %p155 = scmp.ne.s32.totalorder %s140, %s154
      %p156 = scmp.eq.s32.totalorder %s25, 0
      %p157 = por %p155, %p156
      %s158 = ssub.s32 %s19, %s26
      %p159 = scmp.eq.s32.totalorder %s158, 0
      %s161 = sadd.s32 %s160, 1
      %s162 = scalar_select %p159, %s160, %s161
      %p165 = pneg %p159
      %p166 = scmp.eq.s32.totalorder %s19, 1
      %p167 = por %p165, %p166
      %p168 = scmp.ne.s32.totalorder %s160, %s163
      %p169 = scmp.eq.s32.totalorder %s19, 0
      %p170 = por %p168, %p169
      %p171 = scmp.ne.s32.totalorder %s160, %s163
      %p172 = scmp.eq.s32.totalorder %s24, 1
      %p173 = por %p171, %p172
      %p174 = scmp.ne.s32.totalorder %s163, %s164
      %p175 = scmp.eq.s32.totalorder %s24, 0
      %p176 = por %p174, %p175
      %p177 = scmp.ne.s32.totalorder %s163, %s164
      %p178 = scmp.eq.s32.totalorder %s25, 1
      %p179 = por %p177, %p178
      %p181 = scmp.ne.s32.totalorder %s164, %s180
      %p182 = scmp.eq.s32.totalorder %s25, 0
      %p183 = por %p181, %p182
      %p184 = scmp.le.s32.totalorder 1, %s19
      %p185 = scmp.lt.s32.totalorder %s19, 3
      %p186 = pnand %p184, %p185
      %p187 = pneg %p186
      // Predicated region
      $region9: #{tpu_custom_call.1} parent=5 // pred_check
        _
      $region10: #{tpu_custom_call.1} parent=5 // pred_check_branch
        %189 = sbr.rel (%p186) target = $region12
      $region11: #{tpu_custom_call.1} parent=5 // pred_region
        %s190 = ssub.s32 %s19, 1
        // Predicated region
        $region13: #{tpu_custom_call.1} parent=11 // pred_check
          %p191 = pneg %p66
        $region14: #{tpu_custom_call.1} parent=11 // pred_check_branch
          %193 = sbr.rel (%p191) target = $region16
        $region15: #{tpu_custom_call.1} parent=11 // pred_region
          _
        $region16: #{tpu_custom_call.1} parent=11 // pred_fallthru
          _
        // Predicated region
        $region17: #{tpu_custom_call.1} parent=11 // pred_check
          %p194 = pneg %p87
        $region18: #{tpu_custom_call.1} parent=11 // pred_check_branch
          %196 = sbr.rel (%p194) target = $region20
        $region19: #{tpu_custom_call.1} parent=11 // pred_region
          %s198 = ssub.s32 256, 256
          %199 = vsyncadd [#allocation6], %s198
          %s200 = sshll.u32 [#allocation5], 4
          %s201 = int_to_ptr.vmem [resolvable:$true] %s200
          %206 = dma.hbm_to_vmem [thread:$0]  %s2, 256, %s201, [#allocation6], 128, 128, 8
        $region20: #{tpu_custom_call.1} parent=11 // pred_fallthru
          _
        // Predicated region
        $region21: #{tpu_custom_call.1} parent=11 // pred_check
          %p207 = pneg %p108
        $region22: #{tpu_custom_call.1} parent=11 // pred_check_branch
          %209 = sbr.rel (%p207) target = $region24
        $region23: #{tpu_custom_call.1} parent=11 // pred_region
          _
        $region24: #{tpu_custom_call.1} parent=11 // pred_fallthru
          _
        // Predicated region
        $region25: #{tpu_custom_call.1} parent=11 // pred_check
          %p210 = pneg %p129
        $region26: #{tpu_custom_call.1} parent=11 // pred_check_branch
          %212 = sbr.rel (%p210) target = $region28
        $region27: #{tpu_custom_call.1} parent=11 // pred_region
          %s214 = ssub.s32 2048, 2048
          %215 = vsyncadd [#allocation6], %s214
          %s216 = sshll.u32 [#allocation7], 4
          %s217 = int_to_ptr.vmem [resolvable:$true] %s216
          %222 = dma.hbm_to_vmem [thread:$0]  %s4, 2048, %s217, [#allocation6], 128, 128, 8
        $region28: #{tpu_custom_call.1} parent=11 // pred_fallthru
          _
        // Predicated region
        $region29: #{tpu_custom_call.1} parent=11 // pred_check
          %p223 = pneg %p150
        $region30: #{tpu_custom_call.1} parent=11 // pred_check_branch
          %225 = sbr.rel (%p223) target = $region32
        $region31: #{tpu_custom_call.1} parent=11 // pred_region
          _
        $region32: #{tpu_custom_call.1} parent=11 // pred_fallthru
          _
      $region12: #{tpu_custom_call.1} parent=5 // pred_fallthru
        _
      %p226 = scmp.lt.s32.totalorder %s19, 2
      // Predicated region
      $region33: #{tpu_custom_call.1} parent=5 // pred_check
        %p227 = pneg %p226
      $region34: #{tpu_custom_call.1} parent=5 // pred_check_branch
        %229 = sbr.rel (%p227) target = $region36
      $region35: #{tpu_custom_call.1} parent=5 // pred_region
        // Predicated region
        $region37: #{tpu_custom_call.1} parent=35 // pred_check
          %p230 = pneg %p39
        $region38: #{tpu_custom_call.1} parent=35 // pred_check_branch
          %232 = sbr.rel (%p230) target = $region40
        $region39: #{tpu_custom_call.1} parent=35 // pred_region
          %s233 = sand.u32 %s29, 1
          %s234 = scalar_lea.sflag [#allocation3], %s233
          %s235 = sand.u32 %s29, 1
          %s236 = smul.addr %s235, 8
          %s237 = scalar_lea.vmem [#allocation2], %s236
          %s239 = ssub.s32 128, 128
          %240 = vsyncadd %s234, %s239
          %s241 = smul.addr %s19, 128
          %s242 = scalar_lea.hbm %s0, %s241
          %s244 = sshll.u32 %s237, 4
          %s245 = int_to_ptr.vmem [resolvable:$true] %s244
          %247 = dma.hbm_to_vmem [thread:$0]  %s242, 128, %s245, %s234
        $region40: #{tpu_custom_call.1} parent=35 // pred_fallthru
          _
      $region36: #{tpu_custom_call.1} parent=5 // pred_fallthru
        _
      %p248 = scmp.le.s32.totalorder 1, %s19
      %p249 = scmp.lt.s32.totalorder %s19, 3
      %p250 = pnand %p248, %p249
      %p251 = pneg %p250
      // Predicated region
      $region41: #{tpu_custom_call.1} parent=5 // pred_check
        _
      $region42: #{tpu_custom_call.1} parent=5 // pred_check_branch
        %253 = sbr.rel (%p250) target = $region44
      $region43: #{tpu_custom_call.1} parent=5 // pred_region
        %s254 = ssub.s32 %s19, 1
        %s255 = sand.u32 %s32, 1
        %s256 = scalar_lea.sflag [#allocation3], %s255
        %s257 = sand.u32 %s32, 1
        %s258 = smul.addr %s257, 8
        %s259 = scalar_lea.vmem [#allocation2], %s258
        // Predicated region
        $region45: #{tpu_custom_call.1} parent=43 // pred_check
          %p260 = pneg %p45
        $region46: #{tpu_custom_call.1} parent=43 // pred_check_branch
          %262 = sbr.rel (%p260) target = $region48
        $region47: #{tpu_custom_call.1} parent=43 // pred_region
          %263 = dma.done %s256, 128
        $region48: #{tpu_custom_call.1} parent=43 // pred_fallthru
          _
        // Predicated region
        $region49: #{tpu_custom_call.1} parent=43 // pred_check
          %p264 = pneg %p87
        $region50: #{tpu_custom_call.1} parent=43 // pred_check_branch
          %266 = sbr.rel (%p264) target = $region52
        $region51: #{tpu_custom_call.1} parent=43 // pred_region
          %267 = dma.done [#allocation6], 256
        $region52: #{tpu_custom_call.1} parent=43 // pred_fallthru
          _
        // Predicated region
        $region53: #{tpu_custom_call.1} parent=43 // pred_check
          %p268 = pneg %p129
        $region54: #{tpu_custom_call.1} parent=43 // pred_check_branch
          %270 = sbr.rel (%p268) target = $region56
        $region55: #{tpu_custom_call.1} parent=43 // pred_region
          %271 = dma.done [#allocation6], 2048
        $region56: #{tpu_custom_call.1} parent=43 // pred_fallthru
          _
        %s272 = sand.u32 %s32, 1
        %s273 = scalar_lea.sflag [#allocation3], %s272
        %s274 = sand.u32 %s32, 1
        %s275 = smul.addr %s274, 8
        %s276 = scalar_lea.vmem [#allocation2], %s275
        %p277 = pneg %p45
        %p278 = pneg %p42
        %p279 = pneg %p66
        %p280 = pneg %p63
        %p281 = pneg %p87
        %p282 = pneg %p84
        %p283 = pneg %p108
        %p284 = pneg %p105
        %p285 = pneg %p129
        %p286 = pneg %p126
        %p287 = pneg %p150
        %p288 = pneg %p147
        %p289 = pneg %p176
        %p290 = pneg %p173
        %s291 = sand.u32 %s163, 1
        %s292 = scalar_lea.sflag [#allocation4], %s291
        %s293 = sand.u32 %s163, 1
        %s294 = smul.addr %s293, 8
        %s295 = scalar_lea.vmem [#allocation8], %s294
        %v296 = vld [vmem:[%s259] sm:$0xff]
        %v297 = vld [vmem:[%s1] sm:$0x1]
        %v298 = vld [vmem:[%s1 + $0x1] sm:$0x1]
        %v299 = vlaneseq
        %v300 = vshrl.u32 %v299, 7
        %v301 = vsub.s32 0, %v300
        %v302 = vrot.slane %v297, %v301
        %v303 = vsub.f32 %v296, %v302
        %v304 = vlaneseq
        %v305 = vshrl.u32 %v304, 7
        %v306 = vsub.s32 0, %v305
        %v307 = vrot.slane %v298, %v306
        %v308 = vmul.f32 %v303, %v307
        %v309 = vmax.f32 %v308, -5.0
        %v310 = vmin.f32 %v309, 5.0
        %v311 = vld [vmem:[#allocation5] sm:$0xff]
        %v312 = vld [vmem:[#allocation5 + $0x8] sm:$0xff]
        %v313 = vld [vmem:[%s3] sm:$0x1]
        %v314 = vlaneseq
        %v315 = vshrl.u32 %v314, 7
        %v316 = vsub.s32 0, %v315
        %v317 = vrot.slane %v313, %v316
        %vm318 = vcmask 130048
        %v320 = vsel %vm318, %v310, 0
        %322 = vmatprep.subr.mxu0 0.0
        %323 = vmatpush1.msra.mxu0 %v311
        %324 = vmatprep.subr.mxu0 0.0
        %325 = vmatpush1.msra.mxu0 %v312
        %326 = vmatprep.subr.mxu0 0.0
        %327 = vmatpush1.msra.mxu0 0.0
        %328 = vmatprep.subr.mxu0 0.0
        %329 = vmatpush1.msra.mxu0 0.0
        %330 = vmatprep.subr.mxu0 0.0
        %331 = vmatpush1.msra.mxu0 0.0
        %332 = vmatprep.subr.mxu0 0.0
        %333 = vmatpush1.msra.mxu0 0.0
        %334 = vmatprep.subr.mxu0 0.0
        %335 = vmatpush1.msra.mxu0 0.0
        %336 = vmatprep.subr.mxu0 0.0
        %337 = vmatpush1.msra.mxu0 0.0
        %338 = vmatprep.subr.mxu0 0.0
        %339 = vmatpush1.msra.mxu0 0.0
        %340 = vmatprep.subr.mxu0 0.0
        %341 = vmatpush1.msra.mxu0 0.0
        %342 = vmatprep.subr.mxu0 0.0
        %343 = vmatpush1.msra.mxu0 0.0
        %344 = vmatprep.subr.mxu0 0.0
        %345 = vmatpush1.msra.mxu0 0.0
        %346 = vmatprep.subr.mxu0 0.0
        %347 = vmatpush1.msra.mxu0 0.0
        %348 = vmatprep.subr.mxu0 0.0
        %349 = vmatpush1.msra.mxu0 0.0
        %350 = vmatprep.subr.mxu0 0.0
        %351 = vmatpush1.msra.mxu0 0.0
        %352 = vmatprep.subr.mxu0 0.0
        %353 = vmatpush1.msra.mxu0 0.0
        %354 = vmatprep.subr.mxu0 0.0
        %355 = vmatpush1.msra.mxu0 0.0
        %356 = vmatprep.subr.mxu0 0.0
        %357 = vmatpush1.msra.mxu0 0.0
        %358 = vmatprep.subr.mxu0 0.0
        %359 = vmatpush1.msra.mxu0 0.0
        %360 = vmatprep.subr.mxu0 0.0
        %361 = vmatpush1.msra.mxu0 0.0
        %362 = vmatprep.subr.mxu0 0.0
        %363 = vmatpush1.msra.mxu0 0.0
        %364 = vmatprep.subr.mxu0 0.0
        %365 = vmatpush1.msra.mxu0 0.0
        %366 = vmatprep.subr.mxu0 0.0
        %367 = vmatpush1.msra.mxu0 0.0
        %368 = vmatprep.subr.mxu0 0.0
        %369 = vmatpush1.msra.mxu0 0.0
        %370 = vmatprep.subr.mxu0 0.0
        %371 = vmatpush1.msra.mxu0 0.0
        %372 = vmatprep.subr.mxu0 0.0
        %373 = vmatpush1.msra.mxu0 0.0
        %374 = vmatprep.subr.mxu0 0.0
        %375 = vmatpush1.msra.mxu0 0.0
        %376 = vmatprep.subr.mxu0 0.0
        %377 = vmatpush1.msra.mxu0 0.0
        %378 = vmatprep.subr.mxu0 0.0
        %379 = vmatpush1.msra.mxu0 0.0
        %380 = vmatprep.subr.mxu0 0.0
        %381 = vmatpush1.msra.mxu0 0.0
        %382 = vmatprep.subr.mxu0 0.0
        %383 = vmatpush1.msra.mxu0 0.0
        %384 = vmatprep.subr.mxu0 0.0
        %385 = vmatpush1.msra.mxu0 0.0
        %386 = vmatprep.mubr.f32.mxu0 0.0
        %387 = vmatmul.mubr.f32.gmra.mrb[0].mxu0 %v320
        %v388 = vpop.f32.mrb[0].mxu0
        %v389 = vadd.f32 %v317, %v388
        %v390 = vpop.f32.mrb[0].mxu0
        %391 = vdwg.mxu0
        %v392 = vtanh.pop %v389
        %v393 = vld [vmem:[#allocation7] sm:$0xff]
        %v394 = vld [vmem:[#allocation7 + $0x8] sm:$0xff]
        %v395 = vld [vmem:[#allocation7 + $0x10] sm:$0xff]
        %v396 = vld [vmem:[#allocation7 + $0x18] sm:$0xff]
        %v397 = vld [vmem:[#allocation7 + $0x20] sm:$0xff]
        %v398 = vld [vmem:[#allocation7 + $0x28] sm:$0xff]
        %v399 = vld [vmem:[#allocation7 + $0x30] sm:$0xff]
        %v400 = vld [vmem:[#allocation7 + $0x38] sm:$0xff]
        %v401 = vld [vmem:[#allocation7 + $0x40] sm:$0xff]
        %v402 = vld [vmem:[#allocation7 + $0x48] sm:$0xff]
        %v403 = vld [vmem:[#allocation7 + $0x50] sm:$0xff]
        %v404 = vld [vmem:[#allocation7 + $0x58] sm:$0xff]
        %v405 = vld [vmem:[#allocation7 + $0x60] sm:$0xff]
        %v406 = vld [vmem:[#allocation7 + $0x68] sm:$0xff]
        %v407 = vld [vmem:[#allocation7 + $0x70] sm:$0xff]
        %v408 = vld [vmem:[#allocation7 + $0x78] sm:$0xff]
        %v409 = vld [vmem:[%s3 + $0x1] sm:$0x1]
        %v410 = vlaneseq
        %v411 = vshrl.u32 %v410, 7
        %v412 = vsub.s32 0, %v411
        %v413 = vrot.slane %v409, %v412
        %414 = vmatprep.subr.mxu0 0.0
        %415 = vmatpush1.msra.mxu0 %v393
        %416 = vmatprep.subr.mxu0 0.0
        %417 = vmatpush1.msra.mxu0 %v394
        %418 = vmatprep.subr.mxu0 0.0
        %419 = vmatpush1.msra.mxu0 %v395
        %420 = vmatprep.subr.mxu0 0.0
        %421 = vmatpush1.msra.mxu0 %v396
        %422 = vmatprep.subr.mxu0 0.0
        %423 = vmatpush1.msra.mxu0 %v397
        %424 = vmatprep.subr.mxu0 0.0
        %425 = vmatpush1.msra.mxu0 %v398
        %426 = vmatprep.subr.mxu0 0.0
        %427 = vmatpush1.msra.mxu0 %v399
        %428 = vmatprep.subr.mxu0 0.0
        %429 = vmatpush1.msra.mxu0 %v400
        %430 = vmatprep.subr.mxu0 0.0
        %431 = vmatpush1.msra.mxu0 %v401
        %432 = vmatprep.subr.mxu0 0.0
        %433 = vmatpush1.msra.mxu0 %v402
        %434 = vmatprep.subr.mxu0 0.0
        %435 = vmatpush1.msra.mxu0 %v403
        %436 = vmatprep.subr.mxu0 0.0
        %437 = vmatpush1.msra.mxu0 %v404
        %438 = vmatprep.subr.mxu0 0.0
        %439 = vmatpush1.msra.mxu0 %v405
        %440 = vmatprep.subr.mxu0 0.0
        %441 = vmatpush1.msra.mxu0 %v406
        %442 = vmatprep.subr.mxu0 0.0
        %443 = vmatpush1.msra.mxu0 %v407
        %444 = vmatprep.subr.mxu0 0.0
        %445 = vmatpush1.msra.mxu0 %v408
        %446 = vmatprep.subr.mxu0 0.0
        %447 = vmatpush1.msra.mxu0 0.0
        %448 = vmatprep.subr.mxu0 0.0
        %449 = vmatpush1.msra.mxu0 0.0
        %450 = vmatprep.subr.mxu0 0.0
        %451 = vmatpush1.msra.mxu0 0.0
        %452 = vmatprep.subr.mxu0 0.0
        %453 = vmatpush1.msra.mxu0 0.0
        %454 = vmatprep.subr.mxu0 0.0
        %455 = vmatpush1.msra.mxu0 0.0
        %456 = vmatprep.subr.mxu0 0.0
        %457 = vmatpush1.msra.mxu0 0.0
        %458 = vmatprep.subr.mxu0 0.0
        %459 = vmatpush1.msra.mxu0 0.0
        %460 = vmatprep.subr.mxu0 0.0
        %461 = vmatpush1.msra.mxu0 0.0
        %462 = vmatprep.subr.mxu0 0.0
        %463 = vmatpush1.msra.mxu0 0.0
        %464 = vmatprep.subr.mxu0 0.0
        %465 = vmatpush1.msra.mxu0 0.0
        %466 = vmatprep.subr.mxu0 0.0
        %467 = vmatpush1.msra.mxu0 0.0
        %468 = vmatprep.subr.mxu0 0.0
        %469 = vmatpush1.msra.mxu0 0.0
        %470 = vmatprep.subr.mxu0 0.0
        %471 = vmatpush1.msra.mxu0 0.0
        %472 = vmatprep.subr.mxu0 0.0
        %473 = vmatpush1.msra.mxu0 0.0
        %474 = vmatprep.subr.mxu0 0.0
        %475 = vmatpush1.msra.mxu0 0.0
        %476 = vmatprep.subr.mxu0 0.0
        %477 = vmatpush1.msra.mxu0 0.0
        %478 = vmatprep.mubr.f32.mxu0 0.0
        %479 = vmatmul.mubr.f32.gmra.mrb[0].mxu0 %v392
        %v480 = vpop.f32.mrb[0].mxu0
        %v481 = vadd.f32 %v413, %v480
        %v482 = vpop.f32.mrb[0].mxu0
        %483 = vdwg.mxu0
        %v484 = vtanh.pop %v481
        %v485 = vld [vmem:[%s5] sm:$0x1]
        %v486 = vld [vmem:[%s5 + $0x1] sm:$0x1]
        %v487 = vlaneseq
        %v488 = vshrl.u32 %v487, 7
        %v489 = vsub.s32 0, %v488
        %v490 = vrot.slane %v485, %v489
        %492 = vrot.lane.b32.xlu0 %v490, 64
        %v493 = vpop.permute.xlu0 %492
        %v495 = vmul.f32 %v484, %v493
        %497 = vrot.lane.b32.xlu0 %v495, 64
        %v498 = vpop.permute.xlu0 %497
        %vm500 = vcmask 523264
        %v501 = vsel %vm500, %v498, 0.0
        %502 = vadd.xlane.f32.xlu0 %v501
        %v503 = vpop.xlane.xlu0 %502
        %v504 = vlaneseq
        %v505 = vshrl.u32 %v504, 7
        %v506 = vsub.s32 0, %v505
        %v507 = vrot.slane %v486, %v506
        %v508 = vadd.f32 %v503, %v507
        %510 = vset.pattern.permute.xlu0 0
        %511 = vperm.xlu0 %510, %v508
        %v512 = vpop.permute.xlu0 %511
        %v514 = vsel %vm500, %v484, %v512
        %515 = vst [vmem:[%s295] sm:$0xff] %v514
        %s516 = sand.u32 %s163, 1
        %s517 = scalar_lea.sflag [#allocation4], %s516
        %s518 = sand.u32 %s163, 1
        %s519 = smul.addr %s518, 8
        %s520 = scalar_lea.vmem [#allocation8], %s519
        // Predicated region
        $region57: #{tpu_custom_call.1} parent=43 // pred_check
          %p521 = pneg %p173
        $region58: #{tpu_custom_call.1} parent=43 // pred_check_branch
          %523 = sbr.rel (%p521) target = $region60
        $region59: #{tpu_custom_call.1} parent=43 // pred_region
          %s525 = ssub.s32 128, 128
          %526 = vsyncadd %s517, %s525
          %s527 = smul.addr %s24, 128
          %s528 = scalar_lea.hbm %s6, %s527
          %s530 = sshll.u32 %s520, 4
          %s531 = int_to_ptr.vmem [resolvable:$true] %s530
          %533 = dma.vmem_to_hbm [thread:$0]  %s531, 128, %s528, %s517
        $region60: #{tpu_custom_call.1} parent=43 // pred_fallthru
          _
      $region44: #{tpu_custom_call.1} parent=5 // pred_fallthru
        _
      %p534 = scmp.le.s32.totalorder 2, %s19
      // Predicated region
      $region61: #{tpu_custom_call.1} parent=5 // pred_check
        %p535 = pneg %p534
      $region62: #{tpu_custom_call.1} parent=5 // pred_check_branch
        %537 = sbr.rel (%p535) target = $region64
      $region63: #{tpu_custom_call.1} parent=5 // pred_region
        %s538 = ssub.s32 %s19, 2
        // Predicated region
        $region65: #{tpu_custom_call.1} parent=63 // pred_check
          %p539 = pneg %p179
        $region66: #{tpu_custom_call.1} parent=63 // pred_check_branch
          %541 = sbr.rel (%p539) target = $region68
        $region67: #{tpu_custom_call.1} parent=63 // pred_region
          %s542 = sand.u32 %s164, 1
          %s543 = scalar_lea.sflag [#allocation4], %s542
          %s544 = sand.u32 %s164, 1
          %s545 = smul.addr %s544, 8
          %s546 = scalar_lea.vmem [#allocation8], %s545
          %547 = dma.done %s543, 128
        $region68: #{tpu_custom_call.1} parent=63 // pred_fallthru
          _
      $region64: #{tpu_custom_call.1} parent=5 // pred_fallthru
        _
    $region6: #{tpu_custom_call.1} parent=1 // loop_footer
      %s23 = sadd.s32 1, %s19
    $region7: #{tpu_custom_call.1} parent=1 // loop_footer_branch
      %18 = sbr.rel target = $region3
    $region8: #{tpu_custom_call.1} parent=1 // loop_exit
      _
    %548 = vsyncpa [#allocation3], 1
    %s549 = scalar_lea.sflag [#allocation3], 1
    %550 = vsyncpa %s549, 1
    %551 = vsyncpa [#allocation6], 1
    %552 = vsyncpa [#allocation4], 1
    %s553 = scalar_lea.sflag [#allocation4], 1
    %554 = vsyncpa %s553, 1

</llo_original>
